<compile_context>
chip_gen: v5e
topology: v5e:2x2
jax: 0.10.0
libtpu: 0.0.40
codegen_flags: <defaults>
</compile_context>

<pallas_src>
import jax
import jax.numpy as jnp
from jax.experimental import pallas as pl
from jax.experimental.pallas import tpu as pltpu


def _shifted(x, oh, ow):
    """y[c, h, w] = x[c, h + oh, w + ow], zero-filled out of range (oh, ow in {-1,0,1})."""
    cb, h, w = x.shape
    if ow == -1:
        x = jnp.concatenate(
            [jnp.zeros((cb, h, 1), x.dtype), x[:, :, : w - 1]], axis=2)
    elif ow == 1:
        x = jnp.concatenate(
            [x[:, :, 1:], jnp.zeros((cb, h, 1), x.dtype)], axis=2)
    if oh == -1:
        x = jnp.concatenate(
            [jnp.zeros((cb, 1, w), x.dtype), x[:, : h - 1, :]], axis=1)
    elif oh == 1:
        x = jnp.concatenate(
            [x[:, 1:, :], jnp.zeros((cb, 1, w), x.dtype)], axis=1)
    return x


def dwconv_kernel(x_ref, w_ref, o_ref):
    # x_ref: (Cb, H, W)   w_ref: (Cb, 1, 9)   o_ref: (Cb, H, W)
    x = x_ref[...].astype(jnp.float32)
    wts = w_ref[...].astype(jnp.float32)              # (Cb, 1, 9)
    cb, h, w = x.shape

    acc = jnp.zeros((cb, h, w), jnp.float32)
    for dw in range(3):                               # share the lane-axis shift
        xw = _shifted(x, 0, dw - 1)
        for dh in range(3):
            y = _shifted(xw, dh - 1, 0)
            t = dh * 3 + dw
            # per-channel tap weight, (Cb,1,1) broadcast over (Cb,H,W)
            acc = acc + wts[:, :, t:t + 1] * y
    o_ref[...] = acc.astype(o_ref.dtype)


def dwconv(x, weight):
    """Depthwise 3x3 conv, stride 1, pad 1, no bias.  x: (N,C,H,W), weight: (C,1,3,3)."""
    n, c, h, w = x.shape
    assert weight.shape == (c, 1, 3, 3)
    w_flat = weight.reshape(c, 1, 9)

    itemsize = jnp.dtype(x.dtype).itemsize
    hp = -(-h // 8) * 8            # sublane-padded H (VMEM layout)
    wp = -(-w // 128) * 128        # lane-padded W (VMEM layout)
    per_c_f32 = hp * wp * 4        # f32 working footprint of one channel plane

    # Channel tile: largest divisor of C whose f32 plane slab stays <= ~2 MiB,
    # so double-buffered in/out + the in-kernel shifted temporaries fit
    # comfortably in scoped VMEM on v5e / v6e / v7x.
    budget = 2 * 1024 * 1024
    cb = 1
    for cand in range(c, 0, -1):
        if c % cand == 0 and cand * per_c_f32 <= budget:
            cb = cand
            break
    # TODO(synk): if a single channel plane exceeds the budget (huge H*W), a
    # halo-tiled decomposition along H would be needed; not implemented.

    c_blocks = c // cb
    grid = (n * c_blocks,)

    blk_io = cb * hp * wp * itemsize           # one in (or out) buffer
    blk_f32 = cb * per_c_f32                   # one f32 temporary slab
    w_blk = cb * 8 * 128 * 4                   # padded weight block
    est = 4 * blk_io + 8 * blk_f32 + 2 * w_blk + (2 << 20)
    vmem_limit = int(min(64 * 1024 * 1024, max(est, 32 * 1024 * 1024)))

    # Metadata-only reshape: merge the contiguous leading (N, C) dims.
    x3 = x.reshape(n * c, h, w)

    bytes_accessed = int(2 * n * c * h * w * itemsize
                         + c * 9 * jnp.dtype(weight.dtype).itemsize)
    cost = pl.CostEstimate(flops=2 * 9 * n * c * h * w,
                           transcendentals=0,
                           bytes_accessed=bytes_accessed)

    out3 = pl.pallas_call(
        dwconv_kernel,
        out_shape=jax.ShapeDtypeStruct((n * c, h, w), x.dtype),
        grid_spec=pltpu.PrefetchScalarGridSpec(
            num_scalar_prefetch=0,
            grid=grid,
            in_specs=[
                pl.BlockSpec((cb, h, w), lambda m: (m, 0, 0)),
                pl.BlockSpec((cb, 1, 9), lambda m: (m % c_blocks, 0, 0)),
            ],
            out_specs=pl.BlockSpec((cb, h, w), lambda m: (m, 0, 0)),
        ),
        compiler_params=pltpu.CompilerParams(
            dimension_semantics=("parallel",),
            vmem_limit_bytes=vmem_limit),
        cost_estimate=cost,
    )(x3, w_flat)

    return out3.reshape(n, c, h, w)


def reference(x, weight):
    # Pure-JAX depthwise conv (cross-correlation, same as PyTorch Conv2d).
    return jax.lax.conv_general_dilated(
        x, weight,
        window_strides=(1, 1),
        padding=((1, 1), (1, 1)),
        dimension_numbers=("NCHW", "OIHW", "NCHW"),
        feature_group_count=x.shape[1])


if __name__ == "__main__":
    key = jax.random.PRNGKey(0)
    N, C, H, W = 2, 4, 16, 16
    kx, kw = jax.random.split(key)
    x = jax.random.normal(kx, (N, C, H, W), dtype=jnp.float32)
    weight = jax.random.normal(kw, (C, 1, 3, 3), dtype=jnp.float32) * 0.2

    out = dwconv(x, weight)
    out = jax.block_until_ready(out)

    ref = reference(x, weight)
    assert out.shape == (N, C, H, W)
    assert jnp.allclose(out, ref, atol=1e-4, rtol=1e-4), "mismatch vs reference"
    print("KERNEL_OK")
</pallas_src>

<mosaic_0001>
module attributes {stable_mosaic.version = 11 : i64} {
  func.func @dwconv_kernel(%arg0: i32, %arg1: memref<4x16x16xf32, #tpu.memory_space<vmem>>, %arg2: memref<4x1x9xf32, #tpu.memory_space<vmem>>, %arg3: memref<4x16x16xf32, #tpu.memory_space<vmem>>) attributes {dimension_semantics = [#tpu.dimension_semantics<parallel>], iteration_bounds = array<i64: 2>, scalar_prefetch = 0 : i64, scratch_operands = 0 : i64, tpu.core_type = #tpu.core_type<tc>, window_params = [{transform_indices = @transform_0, window_bounds = array<i64: 4, 16, 16>}, {transform_indices = @transform_1, window_bounds = array<i64: 4, 1, 9>}, {transform_indices = @transform_2, window_bounds = array<i64: 4, 16, 16>}]} {
    %c0 = arith.constant 0 : index
    %c0_0 = arith.constant 0 : index
    %c0_1 = arith.constant 0 : index
    %0 = vector.load %arg1[%c0, %c0_0, %c0_1] : memref<4x16x16xf32, #tpu.memory_space<vmem>>, vector<4x16x16xf32>
    %c0_2 = arith.constant 0 : index
    %c0_3 = arith.constant 0 : index
    %c0_4 = arith.constant 0 : index
    %1 = vector.load %arg2[%c0_2, %c0_3, %c0_4] : memref<4x1x9xf32, #tpu.memory_space<vmem>>, vector<4x1x9xf32>
    %cst = arith.constant 0.000000e+00 : f32
    %2 = vector.broadcast %cst : f32 to vector<4x16x16xf32>
    %cst_5 = arith.constant 0.000000e+00 : f32
    %3 = vector.broadcast %cst_5 : f32 to vector<4x16x1xf32>
    %4 = vector.extract_strided_slice %0 {offsets = [0, 0, 0], sizes = [4, 16, 15], strides = [1, 1, 1]} : vector<4x16x16xf32> to vector<4x16x15xf32>
    %5 = tpu.concatenate %3, %4 in 2 : vector<4x16x1xf32>, vector<4x16x15xf32> -> vector<4x16x16xf32>
    %cst_6 = arith.constant 0.000000e+00 : f32
    %6 = vector.broadcast %cst_6 : f32 to vector<4x1x16xf32>
    %7 = vector.extract_strided_slice %5 {offsets = [0, 0, 0], sizes = [4, 15, 16], strides = [1, 1, 1]} : vector<4x16x16xf32> to vector<4x15x16xf32>
    %8 = tpu.concatenate %6, %7 in 1 : vector<4x1x16xf32>, vector<4x15x16xf32> -> vector<4x16x16xf32>
    %9 = vector.extract_strided_slice %1 {offsets = [0, 0, 0], sizes = [4, 1, 1], strides = [1, 1, 1]} : vector<4x1x9xf32> to vector<4x1x1xf32>
    %10 = vector.broadcast %9 : vector<4x1x1xf32> to vector<4x16x16xf32>
    %11 = arith.mulf %10, %8 : vector<4x16x16xf32>
    %12 = arith.addf %2, %11 : vector<4x16x16xf32>
    %13 = vector.extract_strided_slice %1 {offsets = [0, 0, 3], sizes = [4, 1, 1], strides = [1, 1, 1]} : vector<4x1x9xf32> to vector<4x1x1xf32>
    %14 = vector.broadcast %13 : vector<4x1x1xf32> to vector<4x16x16xf32>
    %15 = arith.mulf %14, %5 : vector<4x16x16xf32>
    %16 = arith.addf %12, %15 : vector<4x16x16xf32>
    %17 = vector.extract_strided_slice %5 {offsets = [0, 1, 0], sizes = [4, 15, 16], strides = [1, 1, 1]} : vector<4x16x16xf32> to vector<4x15x16xf32>
    %cst_7 = arith.constant 0.000000e+00 : f32
    %18 = vector.broadcast %cst_7 : f32 to vector<4x1x16xf32>
    %19 = tpu.concatenate %17, %18 in 1 : vector<4x15x16xf32>, vector<4x1x16xf32> -> vector<4x16x16xf32>
    %20 = vector.extract_strided_slice %1 {offsets = [0, 0, 6], sizes = [4, 1, 1], strides = [1, 1, 1]} : vector<4x1x9xf32> to vector<4x1x1xf32>
    %21 = vector.broadcast %20 : vector<4x1x1xf32> to vector<4x16x16xf32>
    %22 = arith.mulf %21, %19 : vector<4x16x16xf32>
    %23 = arith.addf %16, %22 : vector<4x16x16xf32>
    %cst_8 = arith.constant 0.000000e+00 : f32
    %24 = vector.broadcast %cst_8 : f32 to vector<4x1x16xf32>
    %25 = vector.extract_strided_slice %0 {offsets = [0, 0, 0], sizes = [4, 15, 16], strides = [1, 1, 1]} : vector<4x16x16xf32> to vector<4x15x16xf32>
    %26 = tpu.concatenate %24, %25 in 1 : vector<4x1x16xf32>, vector<4x15x16xf32> -> vector<4x16x16xf32>
    %27 = vector.extract_strided_slice %1 {offsets = [0, 0, 1], sizes = [4, 1, 1], strides = [1, 1, 1]} : vector<4x1x9xf32> to vector<4x1x1xf32>
    %28 = vector.broadcast %27 : vector<4x1x1xf32> to vector<4x16x16xf32>
    %29 = arith.mulf %28, %26 : vector<4x16x16xf32>
    %30 = arith.addf %23, %29 : vector<4x16x16xf32>
    %31 = vector.extract_strided_slice %1 {offsets = [0, 0, 4], sizes = [4, 1, 1], strides = [1, 1, 1]} : vector<4x1x9xf32> to vector<4x1x1xf32>
    %32 = vector.broadcast %31 : vector<4x1x1xf32> to vector<4x16x16xf32>
    %33 = arith.mulf %32, %0 : vector<4x16x16xf32>
    %34 = arith.addf %30, %33 : vector<4x16x16xf32>
    %35 = vector.extract_strided_slice %0 {offsets = [0, 1, 0], sizes = [4, 15, 16], strides = [1, 1, 1]} : vector<4x16x16xf32> to vector<4x15x16xf32>
    %cst_9 = arith.constant 0.000000e+00 : f32
    %36 = vector.broadcast %cst_9 : f32 to vector<4x1x16xf32>
    %37 = tpu.concatenate %35, %36 in 1 : vector<4x15x16xf32>, vector<4x1x16xf32> -> vector<4x16x16xf32>
    %38 = vector.extract_strided_slice %1 {offsets = [0, 0, 7], sizes = [4, 1, 1], strides = [1, 1, 1]} : vector<4x1x9xf32> to vector<4x1x1xf32>
    %39 = vector.broadcast %38 : vector<4x1x1xf32> to vector<4x16x16xf32>
    %40 = arith.mulf %39, %37 : vector<4x16x16xf32>
    %41 = arith.addf %34, %40 : vector<4x16x16xf32>
    %42 = vector.extract_strided_slice %0 {offsets = [0, 0, 1], sizes = [4, 16, 15], strides = [1, 1, 1]} : vector<4x16x16xf32> to vector<4x16x15xf32>
    %cst_10 = arith.constant 0.000000e+00 : f32
    %43 = vector.broadcast %cst_10 : f32 to vector<4x16x1xf32>
    %44 = tpu.concatenate %42, %43 in 2 : vector<4x16x15xf32>, vector<4x16x1xf32> -> vector<4x16x16xf32>
    %cst_11 = arith.constant 0.000000e+00 : f32
    %45 = vector.broadcast %cst_11 : f32 to vector<4x1x16xf32>
    %46 = vector.extract_strided_slice %44 {offsets = [0, 0, 0], sizes = [4, 15, 16], strides = [1, 1, 1]} : vector<4x16x16xf32> to vector<4x15x16xf32>
    %47 = tpu.concatenate %45, %46 in 1 : vector<4x1x16xf32>, vector<4x15x16xf32> -> vector<4x16x16xf32>
    %48 = vector.extract_strided_slice %1 {offsets = [0, 0, 2], sizes = [4, 1, 1], strides = [1, 1, 1]} : vector<4x1x9xf32> to vector<4x1x1xf32>
    %49 = vector.broadcast %48 : vector<4x1x1xf32> to vector<4x16x16xf32>
    %50 = arith.mulf %49, %47 : vector<4x16x16xf32>
    %51 = arith.addf %41, %50 : vector<4x16x16xf32>
    %52 = vector.extract_strided_slice %1 {offsets = [0, 0, 5], sizes = [4, 1, 1], strides = [1, 1, 1]} : vector<4x1x9xf32> to vector<4x1x1xf32>
    %53 = vector.broadcast %52 : vector<4x1x1xf32> to vector<4x16x16xf32>
    %54 = arith.mulf %53, %44 : vector<4x16x16xf32>
    %55 = arith.addf %51, %54 : vector<4x16x16xf32>
    %56 = vector.extract_strided_slice %44 {offsets = [0, 1, 0], sizes = [4, 15, 16], strides = [1, 1, 1]} : vector<4x16x16xf32> to vector<4x15x16xf32>
    %cst_12 = arith.constant 0.000000e+00 : f32
    %57 = vector.broadcast %cst_12 : f32 to vector<4x1x16xf32>
    %58 = tpu.concatenate %56, %57 in 1 : vector<4x15x16xf32>, vector<4x1x16xf32> -> vector<4x16x16xf32>
    %59 = vector.extract_strided_slice %1 {offsets = [0, 0, 8], sizes = [4, 1, 1], strides = [1, 1, 1]} : vector<4x1x9xf32> to vector<4x1x1xf32>
    %60 = vector.broadcast %59 : vector<4x1x1xf32> to vector<4x16x16xf32>
    %61 = arith.mulf %60, %58 : vector<4x16x16xf32>
    %62 = arith.addf %55, %61 : vector<4x16x16xf32>
    %c0_13 = arith.constant 0 : index
    %c0_14 = arith.constant 0 : index
    %c0_15 = arith.constant 0 : index
    %63 = vector.load %arg3[%c0_13, %c0_14, %c0_15] : memref<4x16x16xf32, #tpu.memory_space<vmem>>, vector<4x16x16xf32>
    tpu.vector_store %arg3[%c0_13, %c0_14, %c0_15], %62 {strides = array<i32>} : memref<4x16x16xf32, #tpu.memory_space<vmem>>, vector<4x16x16xf32>,
    return
  }
  func.func @transform_0(%arg0: i32) -> (i32, i32, i32) {
    %c0_i32 = arith.constant 0 : i32
    %c0_i32_0 = arith.constant 0 : i32
    %c0_i32_1 = arith.constant 0 : i32
    return %arg0, %c0_i32, %c0_i32_0 : i32, i32, i32
  }
  func.func @transform_1(%arg0: i32) -> (i32, i32, i32) {
    %c1_i32 = arith.constant 1 : i32
    %c0_i32 = arith.constant 0 : i32
    %0 = arith.cmpi eq, %c1_i32, %c0_i32 : i32
    %c1_i32_0 = arith.constant 1 : i32
    %1 = arith.select %0, %c1_i32_0, %c1_i32 : i32
    %2 = arith.remsi %arg0, %1 : i32
    %c0_i32_1 = arith.constant 0 : i32
    %3 = arith.cmpi ne, %2, %c0_i32_1 : i32
    %c0_i32_2 = arith.constant 0 : i32
    %4 = arith.cmpi slt, %2, %c0_i32_2 : i32
    %c0_i32_3 = arith.constant 0 : i32
    %5 = arith.cmpi slt, %1, %c0_i32_3 : i32
    %6 = arith.xori %4, %5 : i1
    %7 = arith.andi %6, %3 : i1
    %8 = arith.addi %2, %1 : i32
    %9 = arith.select %7, %8, %2 : i32
    %c0_i32_4 = arith.constant 0 : i32
    %c0_i32_5 = arith.constant 0 : i32
    %c0_i32_6 = arith.constant 0 : i32
    return %9, %c0_i32_4, %c0_i32_5 : i32, i32, i32
  }
  func.func @transform_2(%arg0: i32) -> (i32, i32, i32) {
    %c0_i32 = arith.constant 0 : i32
    %c0_i32_0 = arith.constant 0 : i32
    %c0_i32_1 = arith.constant 0 : i32
    return %arg0, %c0_i32, %c0_i32_0 : i32, i32, i32
  }
}

</mosaic_0001>

<llo_original>
// kernel: tpu_custom_call.1
$region0: #{tpu_custom_call.1}
  #allocation0 [shape = 'u32[]', space=smem, size = 0x4, offset = 0x4, fixed_abs, tag = 'smem constant byte address 0x4 - core index']
  #allocation1 [shape = 'u32[72,128]{1,0:T(1,128)}', space=vmem, size = 0x9000, scoped, tag = 'internal scratch']
  %s0 = inlined_call_operand.hbm [shape: f32[8,16,16], index: 0, kind: input, shape index: {}]
  %s1 = inlined_call_operand.hbm [shape: f32[4,1,9], index: 1, kind: input, shape index: {}]
  %s2 = inlined_call_operand.hbm [shape: f32[8,16,16], index: 2, kind: output, shape index: {}]
  %s3 = sld [smem:[#allocation0]]
  $region49: #{tpu_custom_call.1} parent=0
    _
  %s5 = ssub.s32 1, %s3
  %s6 = scalar_select 0, %s5, %s3
  $region1: #{tpu_custom_call.1} parent=0
    #allocation2 [shape = 'u8[65536]{0}', space=vmem, size = 0x10000, scoped, tag = 'input window, operand 0']
    #allocation3 [shape = 's32[2]{0}', space=sflag, size = 0x8, scoped, tag = 'scoped memory for tpu_custom_call.1']
    #allocation4 [shape = 's32[2]{0}', space=sflag, size = 0x8, scoped, tag = 'scoped memory for tpu_custom_call.1']
    #allocation5 [shape = 'u8[2048]{0}', space=vmem, size = 0x800, scoped, tag = 'input window, operand 1, single buffered']
    #allocation6 [shape = 's32[1]{0}', space=sflag, size = 0x4, scoped, tag = 'scoped memory for tpu_custom_call.1']
    #allocation7 [shape = 'u8[65536]{0}', space=vmem, size = 0x10000, scoped, tag = 'output window, operand 0']
    %7 = vsyncpa [#allocation3], 0
    %s8 = scalar_lea.sflag [#allocation3], 1
    %9 = vsyncpa %s8, 0
    %10 = vsyncpa [#allocation6], 0
    %11 = vsyncpa [#allocation4], 0
    %s12 = scalar_lea.sflag [#allocation4], 1
    %13 = vsyncpa %s12, 0
    loop: start=0, step=1, limit=4
    $region2: #{tpu_custom_call.1} parent=1 // loop_pre_header
      _
    $region3: #{tpu_custom_call.1} parent=1 // loop_header
      %s15 = sphi 0, %s19
      %p16 = scmp.ge.s32.totalorder %s15, 4
      %s25 = sphi 0, %s27
      %s28 = sphi 0, %s25
      %s29 = sphi 0, %s28
      %s45 = sphi 0, %s29
      %s49 = sphi 0, %s49
      %s51 = sphi 0, %s49
      %s52 = sphi 0, %s51
      %s66 = sphi 0, %s52
      %s72 = sphi 0, %s74
      %s75 = sphi 0, %s72
      %s76 = sphi 0, %s75
      %s92 = sphi 0, %s76
    $region4: #{tpu_custom_call.1} parent=1 // loop_header_branch
      %18 = sbr.rel (%p16) target = $region8
    $region5: #{tpu_custom_call.1} parent=1 // loop_body
      %s20 = ssub.s32 %s15, 1
      %s21 = ssub.s32 %s15, 2
      %s22 = sadd.s32 %s15, 1
      %s23 = ssub.s32 %s15, %s22
      %p24 = scmp.eq.s32.totalorder %s23, 0
      %s26 = sadd.s32 %s25, 1
      %s27 = scalar_select %p24, %s25, %s26
      %p30 = pneg %p24
      %p31 = scmp.eq.s32.totalorder %s15, 1
      %p32 = por %p30, %p31
      %p33 = scmp.ne.s32.totalorder %s25, %s28
      %p34 = scmp.eq.s32.totalorder %s15, 0
      %p35 = por %p33, %p34
      %p36 = scmp.ne.s32.totalorder %s25, %s28
      %p37 = scmp.eq.s32.totalorder %s20, 1
      %p38 = por %p36, %p37
      %p39 = scmp.ne.s32.totalorder %s28, %s29
      %p40 = scmp.eq.s32.totalorder %s20, 0
      %p41 = por %p39, %p40
      %p42 = scmp.ne.s32.totalorder %s28, %s29
      %p43 = scmp.eq.s32.totalorder %s21, 1
      %p44 = por %p42, %p43
      %p46 = scmp.ne.s32.totalorder %s29, %s45
      %p47 = scmp.eq.s32.totalorder %s21, 0
      %p48 = por %p46, %p47
      %s50 = sadd.s32 %s49, 1
      %p53 = scmp.eq.s32.totalorder %s15, 1
      %p54 = scmp.ne.s32.totalorder %s49, %s51
      %p55 = scmp.eq.s32.totalorder %s15, 0
      %p56 = por %p54, %p55
      %p57 = scmp.ne.s32.totalorder %s49, %s51
      %p58 = scmp.eq.s32.totalorder %s20, 1
      %p59 = por %p57, %p58
      %p60 = scmp.ne.s32.totalorder %s51, %s52
      %p61 = scmp.eq.s32.totalorder %s20, 0
      %p62 = por %p60, %p61
      %p63 = scmp.ne.s32.totalorder %s51, %s52
      %p64 = scmp.eq.s32.totalorder %s21, 1
      %p65 = por %p63, %p64
      %p67 = scmp.ne.s32.totalorder %s52, %s66
      %p68 = scmp.eq.s32.totalorder %s21, 0
      %p69 = por %p67, %p68
      %s70 = ssub.s32 %s15, %s22
      %p71 = scmp.eq.s32.totalorder %s70, 0
      %s73 = sadd.s32 %s72, 1
      %s74 = scalar_select %p71, %s72, %s73
      %p77 = pneg %p71
      %p78 = scmp.eq.s32.totalorder %s15, 1
      %p79 = por %p77, %p78
      %p80 = scmp.ne.s32.totalorder %s72, %s75
      %p81 = scmp.eq.s32.totalorder %s15, 0
      %p82 = por %p80, %p81
      %p83 = scmp.ne.s32.totalorder %s72, %s75
      %p84 = scmp.eq.s32.totalorder %s20, 1
      %p85 = por %p83, %p84
      %p86 = scmp.ne.s32.totalorder %s75, %s76
      %p87 = scmp.eq.s32.totalorder %s20, 0
      %p88 = por %p86, %p87
      %p89 = scmp.ne.s32.totalorder %s75, %s76
      %p90 = scmp.eq.s32.totalorder %s21, 1
      %p91 = por %p89, %p90
      %p93 = scmp.ne.s32.totalorder %s76, %s92
      %p94 = scmp.eq.s32.totalorder %s21, 0
      %p95 = por %p93, %p94
      %p96 = scmp.le.s32.totalorder 1, %s15
      %p97 = scmp.lt.s32.totalorder %s15, 3
      %p98 = pnand %p96, %p97
      %p99 = pneg %p98
      // Predicated region
      $region9: #{tpu_custom_call.1} parent=5 // pred_check
        _
      $region10: #{tpu_custom_call.1} parent=5 // pred_check_branch
        %101 = sbr.rel (%p98) target = $region12
      $region11: #{tpu_custom_call.1} parent=5 // pred_region
        %s102 = ssub.s32 %s15, 1
        // Predicated region
        $region13: #{tpu_custom_call.1} parent=11 // pred_check
          %p103 = pneg %p62
        $region14: #{tpu_custom_call.1} parent=11 // pred_check_branch
          %105 = sbr.rel (%p103) target = $region16
        $region15: #{tpu_custom_call.1} parent=11 // pred_region
          %107 = vsyncadd [#allocation6], 0
          %s108 = sshll.u32 %s1, 4
          %s109 = int_to_ptr.hbm [resolvable:$true] %s108
          %s110 = sshll.u32 [#allocation5], 4
          %s111 = int_to_ptr.vmem [resolvable:$true] %s110
          %116 = dma.hbm_to_vmem [thread:$0]  %s109, 64, %s111, [#allocation6], 16, 16, 1
        $region16: #{tpu_custom_call.1} parent=11 // pred_fallthru
          _
      $region12: #{tpu_custom_call.1} parent=5 // pred_fallthru
        _
      %p117 = scmp.lt.s32.totalorder %s15, 2
      // Predicated region
      $region17: #{tpu_custom_call.1} parent=5 // pred_check
        %p118 = pneg %p117
      $region18: #{tpu_custom_call.1} parent=5 // pred_check_branch
        %120 = sbr.rel (%p118) target = $region20
      $region19: #{tpu_custom_call.1} parent=5 // pred_region
        // Predicated region
        $region21: #{tpu_custom_call.1} parent=19 // pred_check
          %p121 = pneg %p35
        $region22: #{tpu_custom_call.1} parent=19 // pred_check_branch
          %123 = sbr.rel (%p121) target = $region24
        $region23: #{tpu_custom_call.1} parent=19 // pred_region
          %s124 = sand.u32 %s25, 1
          %s125 = scalar_lea.sflag [#allocation3], %s124
          %s126 = sand.u32 %s25, 1
          %s127 = smul.addr %s126, 64
          %s128 = scalar_lea.vmem [#allocation2], %s127
          %s129 = smul.u32 4, %s15
          %131 = vsyncadd %s125, 0
          %s132 = smul.addr %s129, 2
          %s133 = smul.addr %s132, 8
          %s134 = scalar_lea.hbm %s0, %s133
          %s135 = sshll.u32 %s134, 4
          %s136 = int_to_ptr.hbm [resolvable:$true] %s135
          %s137 = sshll.u32 %s128, 4
          %s138 = int_to_ptr.vmem [resolvable:$true] %s137
          %143 = dma.hbm_to_vmem [thread:$0]  %s136, 1024, %s138, %s125, 128, 128, 8
        $region24: #{tpu_custom_call.1} parent=19 // pred_fallthru
          _
      $region20: #{tpu_custom_call.1} parent=5 // pred_fallthru
        _
      %p144 = scmp.le.s32.totalorder 1, %s15
      %p145 = scmp.lt.s32.totalorder %s15, 3
      %p146 = pnand %p144, %p145
      %p147 = pneg %p146
      // Predicated region
      $region25: #{tpu_custom_call.1} parent=5 // pred_check
        _
      $region26: #{tpu_custom_call.1} parent=5 // pred_check_branch
        %149 = sbr.rel (%p146) target = $region28
      $region27: #{tpu_custom_call.1} parent=5 // pred_region
        %s150 = ssub.s32 %s15, 1
        %s151 = sand.u32 %s28, 1
        %s152 = scalar_lea.sflag [#allocation3], %s151
        %s153 = sand.u32 %s28, 1
        %s154 = smul.addr %s153, 64
        %s155 = scalar_lea.vmem [#allocation2], %s154
        // Predicated region
        $region29: #{tpu_custom_call.1} parent=27 // pred_check
          %p156 = pneg %p41
        $region30: #{tpu_custom_call.1} parent=27 // pred_check_branch
          %158 = sbr.rel (%p156) target = $region32
        $region31: #{tpu_custom_call.1} parent=27 // pred_region
          %160 = dma.done %s152, 1024
        $region32: #{tpu_custom_call.1} parent=27 // pred_fallthru
          _
        // Predicated region
        $region33: #{tpu_custom_call.1} parent=27 // pred_check
          %p161 = pneg %p62
        $region34: #{tpu_custom_call.1} parent=27 // pred_check_branch
          %163 = sbr.rel (%p161) target = $region36
        $region35: #{tpu_custom_call.1} parent=27 // pred_region
          %165 = dma.done [#allocation6], 64
        $region36: #{tpu_custom_call.1} parent=27 // pred_fallthru
          _
        %s166 = sand.u32 %s28, 1
        %s167 = scalar_lea.sflag [#allocation3], %s166
        %s168 = sand.u32 %s28, 1
        %s169 = smul.addr %s168, 64
        %s170 = scalar_lea.vmem [#allocation2], %s169
        %p171 = pneg %p41
        %p172 = pneg %p38
        %p173 = pneg %p62
        %p174 = pneg %p59
        %p175 = pneg %p88
        %p176 = pneg %p85
        %s177 = sand.u32 %s75, 1
        %s178 = scalar_lea.sflag [#allocation4], %s177
        %s179 = sand.u32 %s75, 1
        %s180 = smul.addr %s179, 64
        %s181 = scalar_lea.vmem [#allocation7], %s180
        %s182 = smul.u32 4, %s20
        %s183 = smul.u32 4, %s20
        %v184 = vld [vmem:[%s155] sm:$0xff]
        %v185 = vld [vmem:[%s155 + $0x8] sm:$0xff]
        %v186 = vld [vmem:[%s155 + $0x10] sm:$0xff]
        %v187 = vld [vmem:[%s155 + $0x18] sm:$0xff]
        %v188 = vld [vmem:[%s155 + $0x20] sm:$0xff]
        %v189 = vld [vmem:[%s155 + $0x28] sm:$0xff]
        %v190 = vld [vmem:[%s155 + $0x30] sm:$0xff]
        %v191 = vld [vmem:[%s155 + $0x38] sm:$0xff]
        %v192 = vld [vmem:[#allocation5] sm:$0x1]
        %v193 = vld [vmem:[#allocation5 + $0x1] sm:$0x1]
        %v194 = vld [vmem:[#allocation5 + $0x2] sm:$0x1]
        %v195 = vld [vmem:[#allocation5 + $0x3] sm:$0x1]
        %204 = vrot.lane.b32.xlu0 %v184, 1
        %v205 = vpop.permute.xlu0 %204
        %206 = vrot.lane.b32.xlu0 %v185, 1
        %v207 = vpop.permute.xlu0 %206
        %208 = vrot.lane.b32.xlu0 %v186, 1
        %v209 = vpop.permute.xlu0 %208
        %210 = vrot.lane.b32.xlu0 %v187, 1
        %v211 = vpop.permute.xlu0 %210
        %212 = vrot.lane.b32.xlu0 %v188, 1
        %v213 = vpop.permute.xlu0 %212
        %214 = vrot.lane.b32.xlu0 %v189, 1
        %v215 = vpop.permute.xlu0 %214
        %216 = vrot.lane.b32.xlu0 %v190, 1
        %v217 = vpop.permute.xlu0 %216
        %218 = vrot.lane.b32.xlu0 %v191, 1
        %v219 = vpop.permute.xlu0 %218
        %vm228 = vcmask 7168
        %v229 = vsel %vm228, 0.0, %v205
        %v230 = vsel %vm228, 0.0, %v207
        %v231 = vsel %vm228, 0.0, %v209
        %v232 = vsel %vm228, 0.0, %v211
        %v233 = vsel %vm228, 0.0, %v213
        %v234 = vsel %vm228, 0.0, %v215
        %v235 = vsel %vm228, 0.0, %v217
        %v236 = vsel %vm228, 0.0, %v219
        %vm245 = vcmask 1040384
        %v246 = vrot.slane %v229, 7
        %v247 = vrot.slane %v230, 7
        %v248 = vsel %vm245, %v246, %v247
        %v249 = vrot.slane %v231, 7
        %v250 = vrot.slane %v232, 7
        %v251 = vsel %vm245, %v249, %v250
        %v252 = vrot.slane %v233, 7
        %v253 = vrot.slane %v234, 7
        %v254 = vsel %vm245, %v252, %v253
        %v255 = vrot.slane %v235, 7
        %v256 = vrot.slane %v236, 7
        %v257 = vsel %vm245, %v255, %v256
        %v266 = vsel %vm245, 0.0, %v246
        %v267 = vsel %vm245, 0.0, %v249
        %v268 = vsel %vm245, 0.0, %v252
        %v269 = vsel %vm245, 0.0, %v255
        %v274 = vperm.slane %v192, 0
        %v275 = vperm.slane %v193, 0
        %v276 = vperm.slane %v194, 0
        %v277 = vperm.slane %v195, 0
        %278 = vset.pattern.permute.xlu0 0
        %279 = vperm.xlu0 %278, %v274
        %v280 = vpop.permute.xlu0 %279
        %282 = vset.pattern.permute.xlu0 0
        %283 = vperm.xlu0 %282, %v275
        %v284 = vpop.permute.xlu0 %283
        %286 = vset.pattern.permute.xlu0 0
        %287 = vperm.xlu0 %286, %v276
        %v288 = vpop.permute.xlu0 %287
        %290 = vset.pattern.permute.xlu0 0
        %291 = vperm.xlu0 %290, %v277
        %v292 = vpop.permute.xlu0 %291
        %v294 = vmul.f32 %v280, %v266
        %v295 = vmul.f32 %v280, %v248
        %v296 = vmul.f32 %v284, %v267
        %v297 = vmul.f32 %v284, %v251
        %v298 = vmul.f32 %v288, %v268
        %v299 = vmul.f32 %v288, %v254
        %v300 = vmul.f32 %v292, %v269
        %v301 = vmul.f32 %v292, %v257
        %v302 = vadd.f32 %v294, 0.0
        %v303 = vadd.f32 %v295, 0.0
        %v304 = vadd.f32 %v296, 0.0
        %v305 = vadd.f32 %v297, 0.0
        %v306 = vadd.f32 %v298, 0.0
        %v307 = vadd.f32 %v299, 0.0
        %v308 = vadd.f32 %v300, 0.0
        %v309 = vadd.f32 %v301, 0.0
        %310 = vset.pattern.permute.xlu0 3
        %311 = vperm.xlu0 %310, %v274
        %v312 = vpop.permute.xlu0 %311
        %314 = vset.pattern.permute.xlu0 3
        %315 = vperm.xlu0 %314, %v275
        %v316 = vpop.permute.xlu0 %315
        %318 = vset.pattern.permute.xlu0 3
        %319 = vperm.xlu0 %318, %v276
        %v320 = vpop.permute.xlu0 %319
        %322 = vset.pattern.permute.xlu0 3
        %323 = vperm.xlu0 %322, %v277
        %v324 = vpop.permute.xlu0 %323
        %v326 = vmul.f32 %v312, %v229
        %v327 = vmul.f32 %v312, %v230
        %v328 = vmul.f32 %v316, %v231
        %v329 = vmul.f32 %v316, %v232
        %v330 = vmul.f32 %v320, %v233
        %v331 = vmul.f32 %v320, %v234
        %v332 = vmul.f32 %v324, %v235
        %v333 = vmul.f32 %v324, %v236
        %v334 = vadd.f32 %v302, %v326
        %v335 = vadd.f32 %v303, %v327
        %v336 = vadd.f32 %v304, %v328
        %v337 = vadd.f32 %v305, %v329
        %v338 = vadd.f32 %v306, %v330
        %v339 = vadd.f32 %v307, %v331
        %v340 = vadd.f32 %v308, %v332
        %v341 = vadd.f32 %v309, %v333
        %vm342 = vcmask 1046528
        %v343 = vrot.slane %v229, 1
        %v344 = vrot.slane %v230, 1
        %v345 = vsel %vm342, %v343, %v344
        %v346 = vrot.slane %v231, 1
        %v347 = vrot.slane %v232, 1
        %v348 = vsel %vm342, %v346, %v347
        %v349 = vrot.slane %v233, 1
        %v350 = vrot.slane %v234, 1
        %v351 = vsel %vm342, %v349, %v350
        %v352 = vrot.slane %v235, 1
        %v353 = vrot.slane %v236, 1
        %v354 = vsel %vm342, %v352, %v353
        %v363 = vsel %vm342, %v344, 0.0
        %v364 = vsel %vm342, %v347, 0.0
        %v365 = vsel %vm342, %v350, 0.0
        %v366 = vsel %vm342, %v353, 0.0
        %367 = vset.pattern.permute.xlu0 6
        %368 = vperm.xlu0 %367, %v274
        %v369 = vpop.permute.xlu0 %368
        %371 = vset.pattern.permute.xlu0 6
        %372 = vperm.xlu0 %371, %v275
        %v373 = vpop.permute.xlu0 %372
        %375 = vset.pattern.permute.xlu0 6
        %376 = vperm.xlu0 %375, %v276
        %v377 = vpop.permute.xlu0 %376
        %379 = vset.pattern.permute.xlu0 6
        %380 = vperm.xlu0 %379, %v277
        %v381 = vpop.permute.xlu0 %380
        %v383 = vmul.f32 %v369, %v345
        %v384 = vmul.f32 %v369, %v363
        %v385 = vmul.f32 %v373, %v348
        %v386 = vmul.f32 %v373, %v364
        %v387 = vmul.f32 %v377, %v351
        %v388 = vmul.f32 %v377, %v365
        %v389 = vmul.f32 %v381, %v354
        %v390 = vmul.f32 %v381, %v366
        %v391 = vadd.f32 %v334, %v383
        %v392 = vadd.f32 %v335, %v384
        %v393 = vadd.f32 %v336, %v385
        %v394 = vadd.f32 %v337, %v386
        %v395 = vadd.f32 %v338, %v387
        %v396 = vadd.f32 %v339, %v388
        %v397 = vadd.f32 %v340, %v389
        %v398 = vadd.f32 %v341, %v390
        %v399 = vrot.slane %v184, 7
        %v400 = vrot.slane %v185, 7
        %v401 = vsel %vm245, %v399, %v400
        %v402 = vrot.slane %v186, 7
        %v403 = vrot.slane %v187, 7
        %v404 = vsel %vm245, %v402, %v403
        %v405 = vrot.slane %v188, 7
        %v406 = vrot.slane %v189, 7
        %v407 = vsel %vm245, %v405, %v406
        %v408 = vrot.slane %v190, 7
        %v409 = vrot.slane %v191, 7
        %v410 = vsel %vm245, %v408, %v409
        %v419 = vsel %vm245, 0.0, %v399
        %v420 = vsel %vm245, 0.0, %v402
        %v421 = vsel %vm245, 0.0, %v405
        %v422 = vsel %vm245, 0.0, %v408
        %423 = vset.pattern.permute.xlu0 1
        %424 = vperm.xlu0 %423, %v274
        %v425 = vpop.permute.xlu0 %424
        %427 = vset.pattern.permute.xlu0 1
        %428 = vperm.xlu0 %427, %v275
        %v429 = vpop.permute.xlu0 %428
        %431 = vset.pattern.permute.xlu0 1
        %432 = vperm.xlu0 %431, %v276
        %v433 = vpop.permute.xlu0 %432
        %435 = vset.pattern.permute.xlu0 1
        %436 = vperm.xlu0 %435, %v277
        %v437 = vpop.permute.xlu0 %436
        %v439 = vmul.f32 %v425, %v419
        %v440 = vmul.f32 %v425, %v401
        %v441 = vmul.f32 %v429, %v420
        %v442 = vmul.f32 %v429, %v404
        %v443 = vmul.f32 %v433, %v421
        %v444 = vmul.f32 %v433, %v407
        %v445 = vmul.f32 %v437, %v422
        %v446 = vmul.f32 %v437, %v410
        %v447 = vadd.f32 %v391, %v439
        %v448 = vadd.f32 %v392, %v440
        %v449 = vadd.f32 %v393, %v441
        %v450 = vadd.f32 %v394, %v442
        %v451 = vadd.f32 %v395, %v443
        %v452 = vadd.f32 %v396, %v444
        %v453 = vadd.f32 %v397, %v445
        %v454 = vadd.f32 %v398, %v446
        %455 = vset.pattern.permute.xlu0 4
        %456 = vperm.xlu0 %455, %v274
        %v457 = vpop.permute.xlu0 %456
        %459 = vset.pattern.permute.xlu0 4
        %460 = vperm.xlu0 %459, %v275
        %v461 = vpop.permute.xlu0 %460
        %463 = vset.pattern.permute.xlu0 4
        %464 = vperm.xlu0 %463, %v276
        %v465 = vpop.permute.xlu0 %464
        %467 = vset.pattern.permute.xlu0 4
        %468 = vperm.xlu0 %467, %v277
        %v469 = vpop.permute.xlu0 %468
        %v471 = vmul.f32 %v457, %v184
        %v472 = vmul.f32 %v457, %v185
        %v473 = vmul.f32 %v461, %v186
        %v474 = vmul.f32 %v461, %v187
        %v475 = vmul.f32 %v465, %v188
        %v476 = vmul.f32 %v465, %v189
        %v477 = vmul.f32 %v469, %v190
        %v478 = vmul.f32 %v469, %v191
        %v479 = vadd.f32 %v447, %v471
        %v480 = vadd.f32 %v448, %v472
        %v481 = vadd.f32 %v449, %v473
        %v482 = vadd.f32 %v450, %v474
        %v483 = vadd.f32 %v451, %v475
        %v484 = vadd.f32 %v452, %v476
        %v485 = vadd.f32 %v453, %v477
        %v486 = vadd.f32 %v454, %v478
        %v487 = vrot.slane %v184, 1
        %v488 = vrot.slane %v185, 1
        %v489 = vsel %vm342, %v487, %v488
        %v490 = vrot.slane %v186, 1
        %v491 = vrot.slane %v187, 1
        %v492 = vsel %vm342, %v490, %v491
        %v493 = vrot.slane %v188, 1
        %v494 = vrot.slane %v189, 1
        %v495 = vsel %vm342, %v493, %v494
        %v496 = vrot.slane %v190, 1
        %v497 = vrot.slane %v191, 1
        %v498 = vsel %vm342, %v496, %v497
        %v507 = vsel %vm342, %v488, 0.0
        %v508 = vsel %vm342, %v491, 0.0
        %v509 = vsel %vm342, %v494, 0.0
        %v510 = vsel %vm342, %v497, 0.0
        %511 = vset.pattern.permute.xlu0 7
        %512 = vperm.xlu0 %511, %v274
        %v513 = vpop.permute.xlu0 %512
        %515 = vset.pattern.permute.xlu0 7
        %516 = vperm.xlu0 %515, %v275
        %v517 = vpop.permute.xlu0 %516
        %519 = vset.pattern.permute.xlu0 7
        %520 = vperm.xlu0 %519, %v276
        %v521 = vpop.permute.xlu0 %520
        %523 = vset.pattern.permute.xlu0 7
        %524 = vperm.xlu0 %523, %v277
        %v525 = vpop.permute.xlu0 %524
        %v527 = vmul.f32 %v513, %v489
        %v528 = vmul.f32 %v513, %v507
        %v529 = vmul.f32 %v517, %v492
        %v530 = vmul.f32 %v517, %v508
        %v531 = vmul.f32 %v521, %v495
        %v532 = vmul.f32 %v521, %v509
        %v533 = vmul.f32 %v525, %v498
        %v534 = vmul.f32 %v525, %v510
        %v535 = vadd.f32 %v479, %v527
        %v536 = vadd.f32 %v480, %v528
        %v537 = vadd.f32 %v481, %v529
        %v538 = vadd.f32 %v482, %v530
        %v539 = vadd.f32 %v483, %v531
        %v540 = vadd.f32 %v484, %v532
        %v541 = vadd.f32 %v485, %v533
        %v542 = vadd.f32 %v486, %v534
        %543 = vrot.lane.b32.xlu0 %v184, 127
        %v544 = vpop.permute.xlu0 %543
        %545 = vrot.lane.b32.xlu0 %v185, 127
        %v546 = vpop.permute.xlu0 %545
        %547 = vrot.lane.b32.xlu0 %v186, 127
        %v548 = vpop.permute.xlu0 %547
        %549 = vrot.lane.b32.xlu0 %v187, 127
        %v550 = vpop.permute.xlu0 %549
        %551 = vrot.lane.b32.xlu0 %v188, 127
        %v552 = vpop.permute.xlu0 %551
        %553 = vrot.lane.b32.xlu0 %v189, 127
        %v554 = vpop.permute.xlu0 %553
        %555 = vrot.lane.b32.xlu0 %v190, 127
        %v556 = vpop.permute.xlu0 %555
        %557 = vrot.lane.b32.xlu0 %v191, 127
        %v558 = vpop.permute.xlu0 %557
        %vm567 = vcmask 121856
        %v568 = vsel %vm567, %v544, 0.0
        %v569 = vsel %vm567, %v546, 0.0
        %v570 = vsel %vm567, %v548, 0.0
        %v571 = vsel %vm567, %v550, 0.0
        %v572 = vsel %vm567, %v552, 0.0
        %v573 = vsel %vm567, %v554, 0.0
        %v574 = vsel %vm567, %v556, 0.0
        %v575 = vsel %vm567, %v558, 0.0
        %v584 = vrot.slane %v568, 7
        %v585 = vrot.slane %v569, 7
        %v586 = vsel %vm245, %v584, %v585
        %v587 = vrot.slane %v570, 7
        %v588 = vrot.slane %v571, 7
        %v589 = vsel %vm245, %v587, %v588
        %v590 = vrot.slane %v572, 7
        %v591 = vrot.slane %v573, 7
        %v592 = vsel %vm245, %v590, %v591
        %v593 = vrot.slane %v574, 7
        %v594 = vrot.slane %v575, 7
        %v595 = vsel %vm245, %v593, %v594
        %v604 = vsel %vm245, 0.0, %v584
        %v605 = vsel %vm245, 0.0, %v587
        %v606 = vsel %vm245, 0.0, %v590
        %v607 = vsel %vm245, 0.0, %v593
        %608 = vset.pattern.permute.xlu0 2
        %609 = vperm.xlu0 %608, %v274
        %v610 = vpop.permute.xlu0 %609
        %612 = vset.pattern.permute.xlu0 2
        %613 = vperm.xlu0 %612, %v275
        %v614 = vpop.permute.xlu0 %613
        %616 = vset.pattern.permute.xlu0 2
        %617 = vperm.xlu0 %616, %v276
        %v618 = vpop.permute.xlu0 %617
        %620 = vset.pattern.permute.xlu0 2
        %621 = vperm.xlu0 %620, %v277
        %v622 = vpop.permute.xlu0 %621
        %v624 = vmul.f32 %v610, %v604
        %v625 = vmul.f32 %v610, %v586
        %v626 = vmul.f32 %v614, %v605
        %v627 = vmul.f32 %v614, %v589
        %v628 = vmul.f32 %v618, %v606
        %v629 = vmul.f32 %v618, %v592
        %v630 = vmul.f32 %v622, %v607
        %v631 = vmul.f32 %v622, %v595
        %v632 = vadd.f32 %v535, %v624
        %v633 = vadd.f32 %v536, %v625
        %v634 = vadd.f32 %v537, %v626
        %v635 = vadd.f32 %v538, %v627
        %v636 = vadd.f32 %v539, %v628
        %v637 = vadd.f32 %v540, %v629
        %v638 = vadd.f32 %v541, %v630
        %v639 = vadd.f32 %v542, %v631
        %640 = vset.pattern.permute.xlu0 5
        %641 = vperm.xlu0 %640, %v274
        %v642 = vpop.permute.xlu0 %641
        %644 = vset.pattern.permute.xlu0 5
        %645 = vperm.xlu0 %644, %v275
        %v646 = vpop.permute.xlu0 %645
        %648 = vset.pattern.permute.xlu0 5
        %649 = vperm.xlu0 %648, %v276
        %v650 = vpop.permute.xlu0 %649
        %652 = vset.pattern.permute.xlu0 5
        %653 = vperm.xlu0 %652, %v277
        %v654 = vpop.permute.xlu0 %653
        %v656 = vmul.f32 %v642, %v568
        %v657 = vmul.f32 %v642, %v569
        %v658 = vmul.f32 %v646, %v570
        %v659 = vmul.f32 %v646, %v571
        %v660 = vmul.f32 %v650, %v572
        %v661 = vmul.f32 %v650, %v573
        %v662 = vmul.f32 %v654, %v574
        %v663 = vmul.f32 %v654, %v575
        %v664 = vadd.f32 %v632, %v656
        %v665 = vadd.f32 %v633, %v657
        %v666 = vadd.f32 %v634, %v658
        %v667 = vadd.f32 %v635, %v659
        %v668 = vadd.f32 %v636, %v660
        %v669 = vadd.f32 %v637, %v661
        %v670 = vadd.f32 %v638, %v662
        %v671 = vadd.f32 %v639, %v663
        %v672 = vrot.slane %v568, 1
        %v673 = vrot.slane %v569, 1
        %v674 = vsel %vm342, %v672, %v673
        %v675 = vrot.slane %v570, 1
        %v676 = vrot.slane %v571, 1
        %v677 = vsel %vm342, %v675, %v676
        %v678 = vrot.slane %v572, 1
        %v679 = vrot.slane %v573, 1
        %v680 = vsel %vm342, %v678, %v679
        %v681 = vrot.slane %v574, 1
        %v682 = vrot.slane %v575, 1
        %v683 = vsel %vm342, %v681, %v682
        %v692 = vsel %vm342, %v673, 0.0
        %v693 = vsel %vm342, %v676, 0.0
        %v694 = vsel %vm342, %v679, 0.0
        %v695 = vsel %vm342, %v682, 0.0
        %696 = vset.pattern.permute.xlu0 8
        %697 = vperm.xlu0 %696, %v274
        %v698 = vpop.permute.xlu0 %697
        %700 = vset.pattern.permute.xlu0 8
        %701 = vperm.xlu0 %700, %v275
        %v702 = vpop.permute.xlu0 %701
        %704 = vset.pattern.permute.xlu0 8
        %705 = vperm.xlu0 %704, %v276
        %v706 = vpop.permute.xlu0 %705
        %708 = vset.pattern.permute.xlu0 8
        %709 = vperm.xlu0 %708, %v277
        %v710 = vpop.permute.xlu0 %709
        %v712 = vmul.f32 %v698, %v674
        %v713 = vmul.f32 %v698, %v692
        %v714 = vmul.f32 %v702, %v677
        %v715 = vmul.f32 %v702, %v693
        %v716 = vmul.f32 %v706, %v680
        %v717 = vmul.f32 %v706, %v694
        %v718 = vmul.f32 %v710, %v683
        %v719 = vmul.f32 %v710, %v695
        %v720 = vadd.f32 %v664, %v712
        %v721 = vadd.f32 %v665, %v713
        %v722 = vadd.f32 %v666, %v714
        %v723 = vadd.f32 %v667, %v715
        %v724 = vadd.f32 %v668, %v716
        %v725 = vadd.f32 %v669, %v717
        %v726 = vadd.f32 %v670, %v718
        %v727 = vadd.f32 %v671, %v719
        %vm728 = vcmask 130048
        %729 = vst.msk [vmem:[%s181] sm:$0xff] %vm728, %v720
        %730 = vst.msk [vmem:[%s181 + $0x8] sm:$0xff] %vm728, %v721
        %731 = vst.msk [vmem:[%s181 + $0x10] sm:$0xff] %vm728, %v722
        %732 = vst.msk [vmem:[%s181 + $0x18] sm:$0xff] %vm728, %v723
        %733 = vst.msk [vmem:[%s181 + $0x20] sm:$0xff] %vm728, %v724
        %734 = vst.msk [vmem:[%s181 + $0x28] sm:$0xff] %vm728, %v725
        %735 = vst.msk [vmem:[%s181 + $0x30] sm:$0xff] %vm728, %v726
        %736 = vst.msk [vmem:[%s181 + $0x38] sm:$0xff] %vm728, %v727
        %s737 = sand.u32 %s75, 1
        %s738 = scalar_lea.sflag [#allocation4], %s737
        %s739 = sand.u32 %s75, 1
        %s740 = smul.addr %s739, 64
        %s741 = scalar_lea.vmem [#allocation7], %s740
        // Predicated region
        $region37: #{tpu_custom_call.1} parent=27 // pred_check
          %p742 = pneg %p85
        $region38: #{tpu_custom_call.1} parent=27 // pred_check_branch
          %744 = sbr.rel (%p742) target = $region40
        $region39: #{tpu_custom_call.1} parent=27 // pred_region
          %s745 = smul.u32 4, %s20
          %747 = vsyncadd %s738, 0
          %s748 = smul.addr %s745, 2
          %s749 = smul.addr %s748, 8
          %s750 = scalar_lea.hbm %s2, %s749
          %s751 = sshll.u32 %s741, 4
          %s752 = int_to_ptr.vmem [resolvable:$true] %s751
          %s753 = sshll.u32 %s750, 4
          %s754 = int_to_ptr.hbm [resolvable:$true] %s753
          %759 = dma.vmem_to_hbm [thread:$0]  %s752, 1024, %s754, %s738, 128, 128, 8
        $region40: #{tpu_custom_call.1} parent=27 // pred_fallthru
          _
      $region28: #{tpu_custom_call.1} parent=5 // pred_fallthru
        _
      %p760 = scmp.le.s32.totalorder 2, %s15
      // Predicated region
      $region41: #{tpu_custom_call.1} parent=5 // pred_check
        %p761 = pneg %p760
      $region42: #{tpu_custom_call.1} parent=5 // pred_check_branch
        %763 = sbr.rel (%p761) target = $region44
      $region43: #{tpu_custom_call.1} parent=5 // pred_region
        %s764 = ssub.s32 %s15, 2
        // Predicated region
        $region45: #{tpu_custom_call.1} parent=43 // pred_check
          %p765 = pneg %p91
        $region46: #{tpu_custom_call.1} parent=43 // pred_check_branch
          %767 = sbr.rel (%p765) target = $region48
        $region47: #{tpu_custom_call.1} parent=43 // pred_region
          %s768 = sand.u32 %s76, 1
          %s769 = scalar_lea.sflag [#allocation4], %s768
          %s770 = sand.u32 %s76, 1
          %s771 = smul.addr %s770, 64
          %s772 = scalar_lea.vmem [#allocation7], %s771
          %774 = dma.done %s769, 1024
        $region48: #{tpu_custom_call.1} parent=43 // pred_fallthru
          _
      $region44: #{tpu_custom_call.1} parent=5 // pred_fallthru
        _
    $region6: #{tpu_custom_call.1} parent=1 // loop_footer
      %s19 = sadd.s32 1, %s15
    $region7: #{tpu_custom_call.1} parent=1 // loop_footer_branch
      %14 = sbr.rel target = $region3
    $region8: #{tpu_custom_call.1} parent=1 // loop_exit
      _
    %775 = vsyncpa [#allocation3], 1
    %s776 = scalar_lea.sflag [#allocation3], 1
    %777 = vsyncpa %s776, 1
    %778 = vsyncpa [#allocation6], 1
    %779 = vsyncpa [#allocation4], 1
    %s780 = scalar_lea.sflag [#allocation4], 1
    %781 = vsyncpa %s780, 1

</llo_original>
